<compile_context>
chip_gen: v6e
topology: v6e:2x2x1
jax: 0.10.0
libtpu: 0.0.40
codegen_flags: <defaults>
</compile_context>

<pallas_src>
import jax
import jax.numpy as jnp
from jax import lax
from jax.experimental import pallas as pl
from jax.experimental.pallas import tpu as pltpu

# ----------------------------- config (small, synthetic) -----------------------------
B = 2                 # batch
NUM_CLIPS = 16        # cfg.MODEL.CCA.NUM_CLIPS  (N)
HIDDEN = 32           # FEATPOOL.HIDDEN_SIZE == cfg.embed_size
CONCEPT_DIM = 8       # cfg.num_attribute (K)
WORD_DIM = 32         # cfg.model.word_dim
NUM_WORDS = 100       # cfg.num_words
SEQ_LEN = 8
T_IN = 32             # raw video frames fed to featpool
V_DIM = 64            # raw video feature dim
CONCEPT_IN = 64       # cfg.input_channel
FFN_DIM = 64          # transformer feed-forward dim (shrunk from 2048)
D_MODEL = NUM_CLIPS + CONCEPT_DIM   # TransformerEncoderLayer d_model = 24


def _bf16(x):
    return x.astype(jnp.bfloat16)


# ======================= Pallas kernel 1: featpool (fused) =======================
def _featpool_kernel(v_ref, w_ref, b_ref, pool_ref, o_ref):
    # v: (B*T, V) f32   w: (V, H) bf16   b: (1, H) f32   pool: (B*N, B*T) bf16
    # o: (B*N, H) f32.  Linear + bias + ReLU + stride-mean pooling (block-diag matmul),
    # whole batch in one invocation (no per-batch grid-step overhead on v5e/v6e).
    y = jnp.maximum(
        jnp.dot(_bf16(v_ref[...]), w_ref[...],
                preferred_element_type=jnp.float32) + b_ref[...], 0.0)
    o_ref[...] = jnp.dot(pool_ref[...], _bf16(y),
                         preferred_element_type=jnp.float32)


def featpool(params, vfeat_in):
    Bb, T, Dv = vfeat_in.shape
    H = params["fp_w"].shape[1]
    N = NUM_CLIPS
    stride = T // N
    # block-diagonal pooling matrix: pool[b*N+n, b*T+t] = 1/stride inside window b,n
    eye_n = jnp.repeat(jnp.eye(N, dtype=jnp.float32), stride, axis=1) / float(stride)
    pool = jnp.kron(jnp.eye(Bb, dtype=jnp.float32), eye_n)             # (B*N, B*T)
    vspec = pl.BlockSpec(memory_space=pltpu.MemorySpace.VMEM)
    out = pl.pallas_call(
        _featpool_kernel,
        out_shape=jax.ShapeDtypeStruct((Bb * N, H), jnp.float32),
        in_specs=[vspec] * 4,
        out_specs=vspec,
    )(vfeat_in.reshape(Bb * T, Dv).astype(jnp.float32),
      _bf16(params["fp_w"]), params["fp_b"].reshape(1, H), _bf16(pool))
    return out.reshape(Bb, N, H)                                       # (B, N, H)


# =============== Pallas kernel 2: fused transformer encoder layer ================
def _layer_norm(x, g, b, eps=1e-5):
    mu = x.mean(-1, keepdims=True)
    var = ((x - mu) ** 2).mean(-1, keepdims=True)
    return (x - mu) * lax.rsqrt(var + eps) * g + b


def _transformer_kernel(x_ref, wqkv_ref, bqkv_ref, wo_ref, bo_ref,
                        ln1g_ref, ln1b_ref, w1_ref, b1_ref, w2_ref, b2_ref,
                        ln2g_ref, ln2b_ref, o_ref):
    # x block: (TB, S, E) — attention-"batch" chunk leading (parallel grid axis),
    # S = PyTorch seq dim (= video batch B here), E = d_model = N + K.
    # TODO(synk): nn.TransformerEncoderLayer is 8-head with dropout; single-head
    # eval-mode simplification (scale 1/sqrt(E)) with dim_feedforward=FFN_DIM.
    TB, S, E = x_ref.shape
    xf = x_ref[...].reshape(TB * S, E)                  # cheap leading-dim merge

    # fused QKV projection: one bf16 MXU matmul, f32 accumulation
    qkv = jnp.dot(_bf16(xf), wqkv_ref[...],
                  preferred_element_type=jnp.float32) + bqkv_ref[...]
    # one-time q/k/v split (3 lane slices), then 3-D views for batched attention
    q = qkv[:, 0:E].reshape(TB, S, E)
    k = qkv[:, E:2 * E].reshape(TB, S, E)
    v = qkv[:, 2 * E:3 * E].reshape(TB, S, E)

    # batched MXU attention (replaces the old unrolled S x S python loops)
    scale = 1.0 / (float(E) ** 0.5)
    logits = jnp.einsum('bse,bte->bst', _bf16(q), _bf16(k),
                        preferred_element_type=jnp.float32) * scale    # (TB, S, S)
    attn = jax.nn.softmax(logits, axis=-1)                             # f32 epilogue
    ctx = jnp.einsum('bst,bte->bse', _bf16(attn), _bf16(v),
                     preferred_element_type=jnp.float32).reshape(TB * S, E)

    ctx = jnp.dot(_bf16(ctx), wo_ref[...],
                  preferred_element_type=jnp.float32) + bo_ref[...]
    x1 = _layer_norm(xf + ctx, ln1g_ref[...], ln1b_ref[...])

    # FFN with fused ReLU.
    # TODO(synk): at production sizes (d_ff=2048, real d_model) tile this contraction
    # over a grid axis with a VMEM f32 accumulator + pl.when init/finalize and set
    # pltpu.CompilerParams(vmem_limit_bytes=...) — v7x has only 64 MiB physical VMEM.
    h = jnp.maximum(jnp.dot(_bf16(x1), w1_ref[...],
                            preferred_element_type=jnp.float32) + b1_ref[...], 0.0)
    h2 = jnp.dot(_bf16(h), w2_ref[...],
                 preferred_element_type=jnp.float32) + b2_ref[...]
    out = _layer_norm(x1 + h2, ln2g_ref[...], ln2b_ref[...])
    o_ref[...] = out.reshape(TB, S, E)


def transformer_layer(params, x):
    # x: (S, Bt, E) in PyTorch's (seq, batch, d_model) sense = (B, HIDDEN, N+K).
    S, Bt, E = x.shape
    TB = 16 if Bt % 16 == 0 else Bt                  # chunk of the attention-batch axis
    x_bt = jnp.transpose(x, (1, 0, 2))               # (Bt, S, E): batch-leading / gridable

    def wspec(shape):
        return pl.BlockSpec(shape, lambda i: (0,) * len(shape))

    out = pl.pallas_call(
        _transformer_kernel,
        out_shape=jax.ShapeDtypeStruct((Bt, S, E), jnp.float32),
        grid=(Bt // TB,),
        in_specs=[
            pl.BlockSpec((TB, S, E), lambda i: (i, 0, 0)),
            wspec((E, 3 * E)), wspec((1, 3 * E)),
            wspec((E, E)), wspec((1, E)),
            wspec((1, E)), wspec((1, E)),
            wspec((E, FFN_DIM)), wspec((1, FFN_DIM)),
            wspec((FFN_DIM, E)), wspec((1, E)),
            wspec((1, E)), wspec((1, E)),
        ],
        out_specs=pl.BlockSpec((TB, S, E), lambda i: (i, 0, 0)),
        # v7x: 2nd TensorCore takes half the Bt chunks; single-TC v5e/v6e: a cheap
        # 2-step serial grid (~0.7 us fixed overhead total).
        compiler_params=pltpu.CompilerParams(dimension_semantics=("parallel",)),
    )(x_bt,
      _bf16(params["tr_wqkv"]), params["tr_bqkv"].reshape(1, -1),
      _bf16(params["tr_wo"]), params["tr_bo"].reshape(1, -1),
      params["tr_ln1_g"].reshape(1, -1), params["tr_ln1_b"].reshape(1, -1),
      _bf16(params["tr_w1"]), params["tr_b1"].reshape(1, -1),
      _bf16(params["tr_w2"]), params["tr_b2"].reshape(1, -1),
      params["tr_ln2_g"].reshape(1, -1), params["tr_ln2_b"].reshape(1, -1))
    return jnp.transpose(out, (1, 0, 2))             # back to (S, Bt, E)


# ============ Pallas kernel 3: fused map projection + CCA score reduction =========
def _scores_kernel(m_ref, coeff_ref, wm_ref, bm_ref, o_ref):
    # m:     (1, C, HW) channel-first map2d slab (HW = N*N on the lane axis)
    # coeff: (1, 4, 4C) block-structured rows: [p*q|0|0|0],[0|q^2|0|0],
    #                                          [0|0|(1-p)*qf|0],[0|0|0|qf^2]
    # wm:    (C, C) simpredictor 1x1 fusion conv (out-channels on rows), ReLU fused
    # bm:    (C, 1)
    # o:     (1, 1, HW) lane-dense output (no masked vst.msk partial stores)
    # Matmuls here are tiny (32x32x256 and 4x128x256) and normalization-sensitive,
    # so they stay f32; the lane-dense layout is the lever in this kernel.
    eps = jnp.float32(1e-12)                         # F.normalize default eps
    m = m_ref[0]                                     # (C, HW)
    mf = jnp.maximum(
        jnp.dot(wm_ref[...], m, preferred_element_type=jnp.float32) + bm_ref[...], 0.0)

    # all four channel reductions as ONE (4, 4C) @ (4C, HW) MXU matmul (4C = 128)
    lhs = jnp.concatenate([mf, mf * mf, m, m * m], axis=0)                # (4C, HW)
    red = jnp.dot(coeff_ref[0], lhs, preferred_element_type=jnp.float32)  # (4, HW)
    n1, d1, n2, d2 = red[0:1], red[1:2], red[2:3], red[3:4]
    # exact divide (F.normalize semantics; review flagged approx reciprocal here)
    o_ref[0] = n1 / jnp.maximum(jnp.sqrt(d1), eps) + n2 / jnp.maximum(jnp.sqrt(d2), eps)


def cca_scores(map2d_cf, queries, queries_fused, wm, bm, v_t_param):
    Bb, C, HW = map2d_cf.shape
    N = NUM_CLIPS
    p = v_t_param.reshape(()).astype(jnp.float32)
    z = jnp.zeros_like(queries)
    # fold v_t_param into the coefficient rows -> no scalar operand in the kernel
    coeff = jnp.stack([
        jnp.concatenate([p * queries, z, z, z], axis=1),
        jnp.concatenate([z, queries * queries, z, z], axis=1),
        jnp.concatenate([z, z, (1.0 - p) * queries_fused, z], axis=1),
        jnp.concatenate([z, z, z, queries_fused * queries_fused], axis=1),
    ], axis=1)                                                         # (B, 4, 4C)
    out = pl.pallas_call(
        _scores_kernel,
        out_shape=jax.ShapeDtypeStruct((Bb, 1, HW), jnp.float32),
        grid=(Bb,),
        in_specs=[
            pl.BlockSpec((1, C, HW), lambda b: (b, 0, 0)),
            pl.BlockSpec((1, 4, 4 * C), lambda b: (b, 0, 0)),
            pl.BlockSpec((C, C), lambda b: (0, 0)),
            pl.BlockSpec((C, 1), lambda b: (0, 0)),
        ],
        out_specs=pl.BlockSpec((1, 1, HW), lambda b: (b, 0, 0)),
        compiler_params=pltpu.CompilerParams(dimension_semantics=("parallel",)),
    )(map2d_cf, coeff, jnp.transpose(wm), bm.reshape(C, 1))
    # torch .squeeze_() semantics (no-op for B=2; drops batch when B==1 like the ref)
    return jnp.squeeze(out.reshape(Bb, N, N))


# --------------------- plain-JAX glue (micro ops, per perf review) ---------------------
def c_gcn(params, x):
    # TODO(synk): real C_GCN loads a co-occurrence adjacency from cfg.adj_file; a fixed
    # deterministic normalized adjacency is used instead.  Micro matmuls -> XLA.
    A = params["cgcn_adj"]                                             # (K, K)
    h = jax.nn.leaky_relu((A @ x) @ params["cgcn_w1"] + params["cgcn_b1"], 0.2)
    h = (A @ h) @ params["cgcn_w2"] + params["cgcn_b2"]
    return h                                                           # (K, HIDDEN)


def feat2d_channel_first(feats):
    # 2D-TAN style sparse max-pool, channel-first, O(N^2) running max:
    #   out[b, c, i*N+j] = max_{i<=t<=j} feats[b, c, t], 0 if j < i
    Bb, C, N = feats.shape
    t = jnp.arange(N)
    lower = t[:, None] <= t[None, :]                                   # [i, t]: t >= i
    masked = jnp.where(lower[None, None, :, :], feats[:, :, None, :], -jnp.inf)
    cm = lax.cummax(masked, axis=3)                                    # running max over t
    upper = t[None, :] >= t[:, None]                                   # [i, j]: j >= i
    m2d = jnp.where(upper[None, None, :, :], cm, 0.0)                  # (B, C, N, N)
    return m2d.reshape(Bb, C, N * N)                                   # channel-first flat


def text_queries(params, tfeat, txt_len):
    # TODO(synk): build_simpredictor's full text encoder is not in the snippet; masked
    # mean pooling + tanh projection is used.  Micro matmul -> XLA.
    Bb, L, Dw = tfeat.shape
    mask = (jnp.arange(L)[None, :] < txt_len[:, None]).astype(jnp.float32)
    pooled = (tfeat * mask[:, :, None]).sum(1) / jnp.maximum(
        txt_len[:, None].astype(jnp.float32), 1.0)
    return jnp.tanh(pooled @ params["sp_wt"] + params["sp_bt"])        # (B, HIDDEN)


def fuse_attention(params, queries, concept_basis):
    qp = queries @ params["fa_w"] + params["fa_b"]                     # (B, H)
    logits = qp @ concept_basis.T / jnp.sqrt(jnp.float32(HIDDEN))
    attn = jax.nn.softmax(logits, axis=-1)
    return queries + attn @ concept_basis                              # (B, H)


# ----------------------------- full CCA forward -----------------------------
def cca_forward(params, words_ids, tmask, vfeat_in, vmask, concept_input_embs):
    concept_basis = c_gcn(params, concept_input_embs)                  # (K, H)
    feats_nh = featpool(params, vfeat_in)                              # (B, N, H)  Pallas
    feats = jnp.transpose(feats_nh, (0, 2, 1))                         # (B, H, N)  glue
    Bb = feats.shape[0]
    cb = jnp.broadcast_to(concept_basis.T[None], (Bb, HIDDEN, CONCEPT_DIM))
    feats = jnp.concatenate([feats, cb], axis=2)                       # (B, H, N+K)
    feats = transformer_layer(params, feats)[:, :, :NUM_CLIPS]         # (B, H, N)  Pallas
    map2d_cf = feat2d_channel_first(feats)                             # (B, C, N*N)
    tfeat = params["word_table"][words_ids]                            # (B, L, WORD_DIM)
    queries = text_queries(params, tfeat, tmask.sum(axis=1))           # (B, H)
    queries_fused = fuse_attention(params, queries, concept_basis)     # (B, H)
    scores2d = cca_scores(map2d_cf, queries, queries_fused,
                          params["sp_wm"], params["sp_bm"],
                          params["v_t_param"])                         # Pallas
    return {"scores2d": scores2d, "vmask": vmask}


# ----------------------------- deterministic parameter init -----------------------------
def init_params(key):
    ks = iter(jax.random.split(key, 16))

    def w(shape):
        return jax.random.normal(next(ks), shape, jnp.float32) / jnp.sqrt(shape[0])

    def b(n):
        return jnp.zeros((n,), jnp.float32)

    adj = 0.7 * jnp.eye(CONCEPT_DIM, dtype=jnp.float32) + 0.3 / CONCEPT_DIM
    adj = adj / adj.sum(axis=1, keepdims=True)

    return {
        "word_table": jax.random.normal(next(ks), (NUM_WORDS, WORD_DIM), jnp.float32) * 0.1,
        "fp_w": w((V_DIM, HIDDEN)), "fp_b": b(HIDDEN),
        "cgcn_adj": adj,
        "cgcn_w1": w((CONCEPT_IN, HIDDEN)), "cgcn_b1": b(HIDDEN),
        "cgcn_w2": w((HIDDEN, HIDDEN)), "cgcn_b2": b(HIDDEN),
        # fused QKV weight (one matmul instead of three)
        "tr_wqkv": w((D_MODEL, 3 * D_MODEL)), "tr_bqkv": b(3 * D_MODEL),
        "tr_wo": w((D_MODEL, D_MODEL)), "tr_bo": b(D_MODEL),
        "tr_w1": w((D_MODEL, FFN_DIM)), "tr_b1": b(FFN_DIM),
        "tr_w2": w((FFN_DIM, D_MODEL)), "tr_b2": b(D_MODEL),
        "tr_ln1_g": jnp.ones((D_MODEL,), jnp.float32), "tr_ln1_b": b(D_MODEL),
        "tr_ln2_g": jnp.ones((D_MODEL,), jnp.float32), "tr_ln2_b": b(D_MODEL),
        "sp_wt": w((WORD_DIM, HIDDEN)), "sp_bt": b(HIDDEN),
        "sp_wm": w((HIDDEN, HIDDEN)), "sp_bm": b(HIDDEN),
        "fa_w": w((HIDDEN, HIDDEN)), "fa_b": b(HIDDEN),
        "v_t_param": jnp.array([0.5], jnp.float32),   # nn.Parameter([0.5])
    }


# ----------------------------- main -----------------------------
if __name__ == "__main__":
    key = jax.random.PRNGKey(0)
    kp, k1, k2, k3 = jax.random.split(key, 4)
    params = init_params(kp)

    words_ids = jax.random.randint(k1, (B, SEQ_LEN), 0, NUM_WORDS)
    lens = jnp.array([5, 8], dtype=jnp.int32)
    tmask = (jnp.arange(SEQ_LEN)[None, :] < lens[:, None]).astype(jnp.float32)
    vfeat_in = jax.random.normal(k2, (B, T_IN, V_DIM), jnp.float32)
    vmask = jnp.ones((B, NUM_CLIPS), jnp.float32)
    concept_input_embs = jax.random.normal(k3, (CONCEPT_DIM, CONCEPT_IN), jnp.float32)

    out = cca_forward(params, words_ids, tmask, vfeat_in, vmask, concept_input_embs)
    jax.block_until_ready(out["scores2d"])
    assert out["scores2d"].shape == (B, NUM_CLIPS, NUM_CLIPS)
    assert bool(jnp.all(jnp.isfinite(out["scores2d"])))
    print("KERNEL_OK")
</pallas_src>

<mosaic_0001>
module attributes {stable_mosaic.version = 11 : i64} {
  func.func @_featpool_kernel(%arg0: memref<64x64xf32, #tpu.memory_space<vmem>>, %arg1: memref<64x32xbf16, #tpu.memory_space<vmem>>, %arg2: memref<1x32xf32, #tpu.memory_space<vmem>>, %arg3: memref<32x64xbf16, #tpu.memory_space<vmem>>, %arg4: memref<32x32xf32, #tpu.memory_space<vmem>>) attributes {dimension_semantics = [], scalar_prefetch = 0 : i64, scratch_operands = 0 : i64, tpu.core_type = #tpu.core_type<tc>} {
    %c0 = arith.constant 0 : index
    %c0_0 = arith.constant 0 : index
    %0 = vector.load %arg0[%c0, %c0_0] : memref<64x64xf32, #tpu.memory_space<vmem>>, vector<64x64xf32>
    %1 = arith.truncf %0 : vector<64x64xf32> to vector<64x64xbf16>
    %c0_1 = arith.constant 0 : index
    %c0_2 = arith.constant 0 : index
    %2 = vector.load %arg1[%c0_1, %c0_2] : memref<64x32xbf16, #tpu.memory_space<vmem>>, vector<64x32xbf16>
    %cst = arith.constant dense<0.000000e+00> : vector<64x32xf32>
    %3 = tpu.matmul %1, %2, %cst {dimension_numbers = #tpu.dot_dimension_numbers<[1], [0], [0], [1], [0, 0, 1, 1], [], []>} : vector<64x64xbf16>, vector<64x32xbf16>, vector<64x32xf32> -> vector<64x32xf32>
    %c0_3 = arith.constant 0 : index
    %c0_4 = arith.constant 0 : index
    %4 = vector.load %arg2[%c0_3, %c0_4] : memref<1x32xf32, #tpu.memory_space<vmem>>, vector<1x32xf32>
    %5 = vector.broadcast %4 : vector<1x32xf32> to vector<64x32xf32>
    %6 = arith.addf %3, %5 : vector<64x32xf32>
    %cst_5 = arith.constant 0.000000e+00 : f32
    %7 = vector.broadcast %cst_5 : f32 to vector<64x32xf32>
    %8 = arith.maximumf %6, %7 : vector<64x32xf32>
    %c0_6 = arith.constant 0 : index
    %c0_7 = arith.constant 0 : index
    %9 = vector.load %arg3[%c0_6, %c0_7] : memref<32x64xbf16, #tpu.memory_space<vmem>>, vector<32x64xbf16>
    %10 = arith.truncf %8 : vector<64x32xf32> to vector<64x32xbf16>
    %cst_8 = arith.constant dense<0.000000e+00> : vector<32x32xf32>
    %11 = tpu.matmul %9, %10, %cst_8 {dimension_numbers = #tpu.dot_dimension_numbers<[1], [0], [0], [1], [0, 0, 1, 1], [], []>} : vector<32x64xbf16>, vector<64x32xbf16>, vector<32x32xf32> -> vector<32x32xf32>
    %c0_9 = arith.constant 0 : index
    %c0_10 = arith.constant 0 : index
    %12 = vector.load %arg4[%c0_9, %c0_10] : memref<32x32xf32, #tpu.memory_space<vmem>>, vector<32x32xf32>
    tpu.vector_store %arg4[%c0_9, %c0_10], %11 {strides = array<i32>} : memref<32x32xf32, #tpu.memory_space<vmem>>, vector<32x32xf32>,
    return
  }
}

</mosaic_0001>

<llo_original>
// kernel: tpu_custom_call.1
$region0: #{tpu_custom_call.1}
  #allocation0 [shape = 'u32[]', space=smem, size = 0x4, offset = 0x4, fixed_abs, tag = 'smem constant byte address 0x4 - core index']
  #allocation1 [shape = 'u32[144,128]{1,0:T(1,128)}', space=vmem, size = 0x12000, scoped, tag = 'internal scratch']
  %s0 = inlined_call_operand.hbm [shape: f32[64,64], index: 0, kind: input, shape index: {}]
  %s1 = inlined_call_operand.vmem [shape: bf16[64,32], index: 1, kind: input, shape index: {}]
  %s2 = inlined_call_operand.vmem [shape: f32[1,32], index: 2, kind: input, shape index: {}]
  %s3 = inlined_call_operand.vmem [shape: bf16[32,64], index: 3, kind: input, shape index: {}]
  %s4 = inlined_call_operand.hbm [shape: f32[32,32], index: 4, kind: output, shape index: {}]
  %s5 = sld [smem:[#allocation0]]
  $region30: #{tpu_custom_call.1} parent=0
    _
  %s7 = ssub.s32 1, %s5
  %s8 = scalar_select 0, %s7, %s5
  $region1: #{tpu_custom_call.1} parent=0
    #allocation2 [shape = 'u8[32768]{0}', space=vmem, size = 0x8000, scoped, tag = 'input window, operand 0, single buffered']
    #allocation3 [shape = 's32[1]{0}', space=sflag, size = 0x4, scoped, tag = 'scoped memory for tpu_custom_call.1']
    #allocation4 [shape = 's32[1]{0}', space=sflag, size = 0x4, scoped, tag = 'scoped memory for tpu_custom_call.1']
    #allocation5 [shape = 'u8[16384]{0}', space=vmem, size = 0x4000, scoped, tag = 'output window, operand 0, single buffered']
    %9 = vsyncpa [#allocation3], 0
    %10 = vsyncpa [#allocation4], 0
    // Predicated region
    $region2: #{tpu_custom_call.1} parent=1 // pred_check
      _
    $region3: #{tpu_custom_call.1} parent=1 // pred_check_branch
      %12 = sbr.rel (0) target = $region5
    $region4: #{tpu_custom_call.1} parent=1 // pred_region
      %s14 = ssub.s32 1024, 1024
      %15 = vsyncadd [#allocation3], %s14
      %s16 = sshll.u32 [#allocation2], 4
      %s17 = int_to_ptr.vmem [resolvable:$true] %s16
      %22 = dma.hbm_to_vmem [thread:$0]  %s0, 1024, %s17, [#allocation3], 128, 128, 8
    $region5: #{tpu_custom_call.1} parent=1 // pred_fallthru
      _
    // Predicated region
    $region6: #{tpu_custom_call.1} parent=1 // pred_check
      _
    $region7: #{tpu_custom_call.1} parent=1 // pred_check_branch
      %24 = sbr.rel (0) target = $region9
    $region8: #{tpu_custom_call.1} parent=1 // pred_region
      _
    $region9: #{tpu_custom_call.1} parent=1 // pred_fallthru
      _
    // Predicated region
    $region10: #{tpu_custom_call.1} parent=1 // pred_check
      _
    $region11: #{tpu_custom_call.1} parent=1 // pred_check_branch
      %26 = sbr.rel (0) target = $region13
    $region12: #{tpu_custom_call.1} parent=1 // pred_region
      _
    $region13: #{tpu_custom_call.1} parent=1 // pred_fallthru
      _
    // Predicated region
    $region14: #{tpu_custom_call.1} parent=1 // pred_check
      _
    $region15: #{tpu_custom_call.1} parent=1 // pred_check_branch
      %28 = sbr.rel (0) target = $region17
    $region16: #{tpu_custom_call.1} parent=1 // pred_region
      _
    $region17: #{tpu_custom_call.1} parent=1 // pred_fallthru
      _
    // Predicated region
    $region18: #{tpu_custom_call.1} parent=1 // pred_check
      _
    $region19: #{tpu_custom_call.1} parent=1 // pred_check_branch
      %30 = sbr.rel (0) target = $region21
    $region20: #{tpu_custom_call.1} parent=1 // pred_region
      %31 = dma.done [#allocation3], 1024
    $region21: #{tpu_custom_call.1} parent=1 // pred_fallthru
      _
    %v33 = vld [vmem:[#allocation2] sm:$0xff]
    %v34 = vld [vmem:[#allocation2 + $0x8] sm:$0xff]
    %v35 = vld [vmem:[#allocation2 + $0x10] sm:$0xff]
    %v36 = vld [vmem:[#allocation2 + $0x18] sm:$0xff]
    %v37 = vld [vmem:[#allocation2 + $0x20] sm:$0xff]
    %v38 = vld [vmem:[#allocation2 + $0x28] sm:$0xff]
    %v39 = vld [vmem:[#allocation2 + $0x30] sm:$0xff]
    %v40 = vld [vmem:[#allocation2 + $0x38] sm:$0xff]
    %v41 = vpack.c.bf16 %v34, %v33
    %v42 = vpack.c.bf16 %v36, %v35
    %v43 = vpack.c.bf16 %v38, %v37
    %v44 = vpack.c.bf16 %v40, %v39
    %v45 = vld [vmem:[%s1] sm:$0xf]
    %v46 = vld [vmem:[%s1 + $0x4] sm:$0xf]
    %v47 = vld [vmem:[%s1 + $0x8] sm:$0xf]
    %v48 = vld [vmem:[%s1 + $0xc] sm:$0xf]
    %v49 = vld [vmem:[%s1 + $0x10] sm:$0xf]
    %v50 = vld [vmem:[%s1 + $0x14] sm:$0xf]
    %v51 = vld [vmem:[%s1 + $0x18] sm:$0xf]
    %v52 = vld [vmem:[%s1 + $0x1c] sm:$0xf]
    %v53 = vld [vmem:[%s2] sm:$0x1]
    %v55 = vlaneseq
    %v56 = vshrl.u32 %v55, 7
    %v57 = vsub.s32 0, %v56
    %v58 = vrot.slane %v53, %v57
    %v68 = vunpack.c.l.b16 %v45
    %v69 = vunpack.c.l.b16 %v46
    %v70 = vunpack.c.l.b16 %v47
    %v71 = vunpack.c.l.b16 %v48
    %v72 = vunpack.c.l.b16 %v49
    %v73 = vunpack.c.l.b16 %v50
    %v74 = vunpack.c.l.b16 %v51
    %v75 = vunpack.c.l.b16 %v52
    %v76 = vpack.c.b16 %v69, %v68
    %v77 = vpack.c.b16 %v71, %v70
    %v78 = vpack.c.b16 %v73, %v72
    %v79 = vpack.c.b16 %v75, %v74
    %vm84 = vcmask 523264
    %v86 = vsel %vm84, %v41, 0
    %v89 = vsel %vm84, %v42, 0
    %v92 = vsel %vm84, %v43, 0
    %v95 = vsel %vm84, %v44, 0
    %97 = vmatprep.subr.bf16.mxu0 0
    %98 = vmatpush1.bf16.msra.mxu0 0
    %99 = vmatprep.subr.bf16.mxu0 0
    %100 = vmatpush1.bf16.msra.mxu0 0
    %101 = vmatprep.subr.bf16.mxu0 0
    %102 = vmatpush1.bf16.msra.mxu0 0
    %103 = vmatprep.subr.bf16.mxu0 0
    %104 = vmatpush1.bf16.msra.mxu0 0
    %105 = vmatprep.subr.bf16.mxu0 0
    %106 = vmatpush1.bf16.msra.mxu0 %v79
    %107 = vmatprep.subr.bf16.mxu0 0
    %108 = vmatpush1.bf16.msra.mxu0 %v78
    %109 = vmatprep.subr.bf16.mxu0 0
    %110 = vmatpush1.bf16.msra.mxu0 %v77
    %111 = vmatprep.subr.bf16.mxu0 0
    %112 = vmatpush1.bf16.msra.mxu0 %v76
    %113 = vmatprep.subr.bf16.mxu0 0
    %114 = vmatpush2.bf16.msra.mxu0 0
    %115 = vmatprep.subr.bf16.mxu0 0
    %116 = vmatpush2.bf16.msra.mxu0 0
    %117 = vmatprep.subr.bf16.mxu0 0
    %118 = vmatpush2.bf16.msra.mxu0 0
    %119 = vmatprep.subr.bf16.mxu0 0
    %120 = vmatpush2.bf16.msra.mxu0 0
    %121 = vmatprep.subr.bf16.mxu0 0
    %122 = vmatpush2.bf16.msra.mxu0 0
    %123 = vmatprep.subr.bf16.mxu0 0
    %124 = vmatpush2.bf16.msra.mxu0 0
    %125 = vmatprep.subr.bf16.mxu0 0
    %126 = vmatpush2.bf16.msra.mxu0 0
    %127 = vmatprep.subr.bf16.mxu0 0
    %128 = vmatpush2.bf16.msra.mxu0 0
    %129 = vmatprep.mubr.bf16.mxu0 0
    %130 = vmatmul.mubr.bf16.gmra.mxu0 %v86
    %v131 = vpop.f32.mrf.mxu0
    %v132 = vadd.f32 %v58, %v131
    %v133 = vpop.f32.mrf.mxu0
    %v134 = vpop.f32.mrf.mxu0
    %v135 = vadd.f32 %v58, %v134
    %v136 = vpop.f32.mrf.mxu0
    %137 = vmatprep.mubr.bf16.mxu0 0
    %138 = vmatmul.mubr.bf16.gmra.mxu0 %v89
    %v139 = vpop.f32.mrf.mxu0
    %v140 = vadd.f32 %v58, %v139
    %v141 = vpop.f32.mrf.mxu0
    %v142 = vpop.f32.mrf.mxu0
    %v143 = vadd.f32 %v58, %v142
    %v144 = vpop.f32.mrf.mxu0
    %145 = vmatprep.mubr.bf16.mxu0 0
    %146 = vmatmul.mubr.bf16.gmra.mxu0 %v92
    %v147 = vpop.f32.mrf.mxu0
    %v148 = vadd.f32 %v58, %v147
    %v149 = vpop.f32.mrf.mxu0
    %v150 = vpop.f32.mrf.mxu0
    %v151 = vadd.f32 %v58, %v150
    %v152 = vpop.f32.mrf.mxu0
    %153 = vmatprep.mubr.bf16.mxu0 0
    %154 = vmatmul.mubr.bf16.gmra.mxu0 %v95
    %v155 = vpop.f32.mrf.mxu0
    %v156 = vadd.f32 %v58, %v155
    %v157 = vpop.f32.mrf.mxu0
    %v158 = vpop.f32.mrf.mxu0
    %v159 = vadd.f32 %v58, %v158
    %v160 = vpop.f32.mrf.mxu0
    %161 = vdwg.mxu0
    %v162 = vmax.f32 %v132, 0.0
    %v163 = vmax.f32 %v135, 0.0
    %v164 = vmax.f32 %v140, 0.0
    %v165 = vmax.f32 %v143, 0.0
    %v166 = vmax.f32 %v148, 0.0
    %v167 = vmax.f32 %v151, 0.0
    %v168 = vmax.f32 %v156, 0.0
    %v169 = vmax.f32 %v159, 0.0
    %v170 = vld [vmem:[%s3] sm:$0xf]
    %v171 = vld [vmem:[%s3 + $0x4] sm:$0xf]
    %v172 = vld [vmem:[%s3 + $0x8] sm:$0xf]
    %v173 = vld [vmem:[%s3 + $0xc] sm:$0xf]
    %v174 = vpack.c.bf16 %v163, %v162
    %v175 = vpack.c.bf16 %v165, %v164
    %v176 = vpack.c.bf16 %v167, %v166
    %v177 = vpack.c.bf16 %v169, %v168
    %v182 = vunpack.c.l.b16 %v170
    %v183 = vunpack.c.l.b16 %v171
    %v184 = vunpack.c.l.b16 %v172
    %v185 = vunpack.c.l.b16 %v173
    %v186 = vpack.c.b16 %v183, %v182
    %v187 = vpack.c.b16 %v185, %v184
    %v189 = vsel %vm84, %v186, 0
    %v192 = vsel %vm84, %v187, 0
    %194 = vmatprep.subr.bf16.mxu0 0
    %195 = vmatpush1.bf16.msra.mxu0 0
    %196 = vmatprep.subr.bf16.mxu0 0
    %197 = vmatpush1.bf16.msra.mxu0 0
    %198 = vmatprep.subr.bf16.mxu0 0
    %199 = vmatpush1.bf16.msra.mxu0 0
    %200 = vmatprep.subr.bf16.mxu0 0
    %201 = vmatpush1.bf16.msra.mxu0 0
    %202 = vmatprep.subr.bf16.mxu0 0
    %203 = vmatpush1.bf16.msra.mxu0 %v177
    %204 = vmatprep.subr.bf16.mxu0 0
    %205 = vmatpush1.bf16.msra.mxu0 %v176
    %206 = vmatprep.subr.bf16.mxu0 0
    %207 = vmatpush1.bf16.msra.mxu0 %v175
    %208 = vmatprep.subr.bf16.mxu0 0
    %209 = vmatpush1.bf16.msra.mxu0 %v174
    %210 = vmatprep.subr.bf16.mxu0 0
    %211 = vmatpush2.bf16.msra.mxu0 0
    %212 = vmatprep.subr.bf16.mxu0 0
    %213 = vmatpush2.bf16.msra.mxu0 0
    %214 = vmatprep.subr.bf16.mxu0 0
    %215 = vmatpush2.bf16.msra.mxu0 0
    %216 = vmatprep.subr.bf16.mxu0 0
    %217 = vmatpush2.bf16.msra.mxu0 0
    %218 = vmatprep.subr.bf16.mxu0 0
    %219 = vmatpush2.bf16.msra.mxu0 0
    %220 = vmatprep.subr.bf16.mxu0 0
    %221 = vmatpush2.bf16.msra.mxu0 0
    %222 = vmatprep.subr.bf16.mxu0 0
    %223 = vmatpush2.bf16.msra.mxu0 0
    %224 = vmatprep.subr.bf16.mxu0 0
    %225 = vmatpush2.bf16.msra.mxu0 0
    %226 = vmatprep.mubr.bf16.mxu0 0
    %227 = vmatmul.mubr.bf16.gmra.mxu0 %v189
    %v228 = vpop.f32.mrf.mxu0
    %v229 = vadd.f32 0.0, %v228
    %v230 = vpop.f32.mrf.mxu0
    %v231 = vpop.f32.mrf.mxu0
    %v232 = vadd.f32 0.0, %v231
    %v233 = vpop.f32.mrf.mxu0
    %234 = vmatprep.mubr.bf16.mxu0 0
    %235 = vmatmul.mubr.bf16.gmra.mxu0 %v192
    %v236 = vpop.f32.mrf.mxu0
    %v237 = vadd.f32 0.0, %v236
    %v238 = vpop.f32.mrf.mxu0
    %v239 = vpop.f32.mrf.mxu0
    %v240 = vadd.f32 0.0, %v239
    %v241 = vpop.f32.mrf.mxu0
    %242 = vdwg.mxu0
    %vm243 = vcmask 261120
    %244 = vst.msk [vmem:[#allocation5] sm:$0xff] %vm243, %v229
    %245 = vst.msk [vmem:[#allocation5 + $0x8] sm:$0xff] %vm243, %v232
    %246 = vst.msk [vmem:[#allocation5 + $0x10] sm:$0xff] %vm243, %v237
    %247 = vst.msk [vmem:[#allocation5 + $0x18] sm:$0xff] %vm243, %v240
    // Predicated region
    $region22: #{tpu_custom_call.1} parent=1 // pred_check
      _
    $region23: #{tpu_custom_call.1} parent=1 // pred_check_branch
      %249 = sbr.rel (0) target = $region25
    $region24: #{tpu_custom_call.1} parent=1 // pred_region
      %s251 = ssub.s32 512, 512
      %252 = vsyncadd [#allocation4], %s251
      %s253 = sshll.u32 [#allocation5], 4
      %s254 = int_to_ptr.vmem [resolvable:$true] %s253
      %259 = dma.vmem_to_hbm [thread:$0]  %s254, 512, %s4, [#allocation4], 128, 128, 8
    $region25: #{tpu_custom_call.1} parent=1 // pred_fallthru
      _
    // Predicated region
    $region26: #{tpu_custom_call.1} parent=1 // pred_check
      _
    $region27: #{tpu_custom_call.1} parent=1 // pred_check_branch
      %261 = sbr.rel (0) target = $region29
    $region28: #{tpu_custom_call.1} parent=1 // pred_region
      %262 = dma.done [#allocation4], 512
    $region29: #{tpu_custom_call.1} parent=1 // pred_fallthru
      _
    %263 = vsyncpa [#allocation3], 1
    %264 = vsyncpa [#allocation4], 1

</llo_original>
